<compile_context>
chip_gen: v7x
topology: tpu7x:2x2x1
jax: 0.10.0
libtpu: 0.0.40
codegen_flags: <defaults>
</compile_context>

<pallas_src>
import functools

import jax
import jax.numpy as jnp
from jax import lax
from jax.experimental import pallas as pl
from jax.experimental.pallas import tpu as pltpu

EPS = 1e-5

_BLOCK_BUDGET_BYTES = 2 << 20    # padded f32 budget per streamed x-block (all gens)
_MIN_SPLIT_BYTES = 512 << 10     # don't split batches across grid steps below this


def _cdiv(a, b):
    return -(-a // b)


def _round_up(a, b):
    return _cdiv(a, b) * b


def _padded_block_bytes(nb, sub, lane):
    """f32 VMEM footprint of an (nb, sub, lane) block after (8, 128) tiling."""
    return nb * _round_up(max(sub, 1), 8) * _round_up(max(lane, 1), 128) * 4


def _choose_time_minor(L, C):
    """True -> work in (B, C, L) layout (time on lanes)."""
    if C % 128 == 0:
        return False
    cm = _padded_block_bytes(1, L, C)   # channel-minor: L sublanes, C lanes
    tm = _padded_block_bytes(1, C, L)   # time-minor:    C sublanes, L lanes
    # The wrapper transposes cost ~2 extra HBM passes; only switch when the
    # padded footprint (and hence masked-store / DMA waste) shrinks >= 2x.
    return 2 * tm <= cm


def _pick_tb(B, per_batch, budget):
    tb = max(1, min(B, budget // per_batch))
    if tb >= B and B > 1:
        # Whole batch fits in one block.  Split into an even number of grid
        # steps (v7x megacore balance) if each step still moves a large tile.
        for steps in (4, 2):
            if B >= steps:
                cand = _cdiv(B, steps)
                if _cdiv(B, cand) % 2 == 0 and cand * per_batch >= _MIN_SPLIT_BYTES:
                    return cand
        return B
    return tb


def _plan_tiles(B, L, C, time_minor, budget):
    """Return (TB, TL); TL == L means a full-length block fits (fused path)."""
    sub, lane = (C, L) if time_minor else (L, C)
    per_batch = _padded_block_bytes(1, sub, lane)
    if per_batch <= budget:
        return _pick_tb(B, per_batch, budget), L
    # Even one batch is too big: keep TB = 1 and split the time axis.
    if time_minor:   # L is the lane axis -> multiples of 128
        tl = max(1, budget // _padded_block_bytes(1, C, 128)) * 128
    else:            # L is the sublane axis -> multiples of 8
        tl = max(1, budget // _padded_block_bytes(1, 8, C)) * 8
    return 1, min(L, tl)


def _compiler_params(dim_sem, block_bytes):
    # 2x in + 2x out double buffers + full-tile f32 intermediates + margin.
    need = 8 * block_bytes + (2 << 20)
    limit = int(min(max(need, 32 << 20), 48 << 20))
    return pltpu.CompilerParams(dimension_semantics=dim_sem,
                                vmem_limit_bytes=limit)


# ----------------------------------------------------------------------------
# Kernels
# ----------------------------------------------------------------------------

def _norm_fused_kernel(x_ref, wb_ref, y_ref, stats_ref, *, time_minor):
    """Single-pass stats + normalize for a block holding the full time axis."""
    x = x_ref[...].astype(jnp.float32)
    if time_minor:                                        # x: (TB, C, L)
        w = wb_ref[:, 0:1].astype(jnp.float32)[None]      # (1, C, 1)
        b = wb_ref[:, 1:2].astype(jnp.float32)[None]
        red = 2
    else:                                                 # x: (TB, L, C)
        w = wb_ref[0:1, :].astype(jnp.float32)[None]      # (1, 1, C)
        b = wb_ref[1:2, :].astype(jnp.float32)[None]
        red = 1
    mean = jnp.mean(x, axis=red, keepdims=True)
    # Two-pass variance: numerically safer than E[x^2]-E[x]^2 for large |mean|/std.
    var = jnp.mean(jnp.square(x - mean), axis=red, keepdims=True)
    std = jnp.sqrt(var + EPS)
    scale = w / std                       # tiny per-(batch, channel) row, exact
    shift = b - mean * scale
    y_ref[...] = (x * scale + shift).astype(y_ref.dtype)  # 2 VPU ops/elem on big tile
    if time_minor:
        stats_ref[:, :, 0:1] = mean
        stats_ref[:, :, 1:2] = std
    else:
        stats_ref[:, 0:1, :] = mean
        stats_ref[:, 1:2, :] = std


def _stats_accum_kernel(x_ref, stats_ref, *, time_minor, seq_len, tile_len, need_mask):
    """Large-L fallback pass 1: accumulate sum / sum-of-squares over L tiles."""
    li = pl.program_id(1)

    @pl.when(li == 0)
    def _init():
        stats_ref[...] = jnp.zeros_like(stats_ref)

    x = x_ref[...].astype(jnp.float32)
    if need_mask:  # partial last L block: zero the out-of-range tail
        if time_minor:
            pos = li * tile_len + lax.broadcasted_iota(jnp.int32, (1, tile_len), 1)
            x = jnp.where((pos < seq_len)[None], x, 0.0)
        else:
            pos = li * tile_len + lax.broadcasted_iota(jnp.int32, (tile_len, 1), 0)
            x = jnp.where((pos < seq_len)[None], x, 0.0)

    if time_minor:                                        # x: (TB, C, TL)
        stats_ref[:, :, 0:1] += jnp.sum(x, axis=2, keepdims=True)
        stats_ref[:, :, 1:2] += jnp.sum(x * x, axis=2, keepdims=True)
    else:                                                 # x: (TB, TL, C)
        stats_ref[:, 0:1, :] += jnp.sum(x, axis=1, keepdims=True)
        stats_ref[:, 1:2, :] += jnp.sum(x * x, axis=1, keepdims=True)

    @pl.when(li == pl.num_programs(1) - 1)
    def _finalize():
        inv_n = 1.0 / seq_len
        if time_minor:
            s = stats_ref[:, :, 0:1]
            ss = stats_ref[:, :, 1:2]
        else:
            s = stats_ref[:, 0:1, :]
            ss = stats_ref[:, 1:2, :]
        mean = s * inv_n
        # Single-pass variance only on the large-L fallback path; clamp at 0.
        var = jnp.maximum(ss * inv_n - mean * mean, 0.0)
        std = jnp.sqrt(var + EPS)
        if time_minor:
            stats_ref[:, :, 0:1] = mean
            stats_ref[:, :, 1:2] = std
        else:
            stats_ref[:, 0:1, :] = mean
            stats_ref[:, 1:2, :] = std


def _apply_rows_kernel(x_ref, ss_ref, y_ref, *, time_minor):
    """y = x * scale + shift with per-(batch, channel) rows packed in ss."""
    x = x_ref[...].astype(jnp.float32)
    if time_minor:                                        # ss: (TB, C, 2)
        scale = ss_ref[:, :, 0:1].astype(jnp.float32)
        shift = ss_ref[:, :, 1:2].astype(jnp.float32)
    else:                                                 # ss: (TB, 2, C)
        scale = ss_ref[:, 0:1, :].astype(jnp.float32)
        shift = ss_ref[:, 1:2, :].astype(jnp.float32)
    y_ref[...] = (x * scale + shift).astype(y_ref.dtype)


# ----------------------------------------------------------------------------
# Wrappers
# ----------------------------------------------------------------------------

def _stats_to_blc(stats, time_minor):
    """Kernel-layout stats -> (mean, std), each (B, 1, C) f32."""
    if time_minor:  # (B, C, 2)
        return (jnp.swapaxes(stats[:, :, 0:1], 1, 2),
                jnp.swapaxes(stats[:, :, 1:2], 1, 2))
    return stats[:, 0:1, :], stats[:, 1:2, :]


def _apply_rows(xk, scale, shift, out_dtype, time_minor, TB, TL):
    """Streamed y = x*scale + shift; xk in kernel layout, scale/shift (B,1,C) f32."""
    B = xk.shape[0]
    if time_minor:
        C, L = xk.shape[1], xk.shape[2]
    else:
        L, C = xk.shape[1], xk.shape[2]
    nb, nl = _cdiv(B, TB), _cdiv(L, TL)
    ss = jnp.concatenate([scale, shift], axis=1)          # (B, 2, C) f32
    if time_minor:
        ss = jnp.swapaxes(ss, 1, 2)                       # (B, C, 2)
        x_spec = pl.BlockSpec((TB, C, TL), lambda i, l: (i, 0, l))
        ss_spec = pl.BlockSpec((TB, C, 2), lambda i, l: (i, 0, 0))
        xblk = _padded_block_bytes(TB, C, TL)
    else:
        x_spec = pl.BlockSpec((TB, TL, C), lambda i, l: (i, l, 0))
        ss_spec = pl.BlockSpec((TB, 2, C), lambda i, l: (i, 0, 0))
        xblk = _padded_block_bytes(TB, TL, C)
    return pl.pallas_call(
        functools.partial(_apply_rows_kernel, time_minor=time_minor),
        out_shape=jax.ShapeDtypeStruct(xk.shape, out_dtype),
        grid_spec=pltpu.PrefetchScalarGridSpec(
            num_scalar_prefetch=0,
            grid=(nb, nl),
            in_specs=[x_spec, ss_spec],
            out_specs=x_spec,
        ),
        compiler_params=_compiler_params(("parallel", "parallel"), xblk),
    )(xk, ss)


def revin_norm(x, affine_weight, affine_bias, *,
               block_budget_bytes=_BLOCK_BUDGET_BYTES):
    """x: (B, L, C) -> (y, mean, stdev); mean/stdev are (B, 1, C) float32."""
    B, L, C = x.shape
    time_minor = _choose_time_minor(L, C)
    w = affine_weight.reshape(C).astype(jnp.float32)
    b = affine_bias.reshape(C).astype(jnp.float32)

    xk = jnp.swapaxes(x, 1, 2) if time_minor else x       # kernel layout
    TB, TL = _plan_tiles(B, L, C, time_minor, block_budget_bytes)
    nb = _cdiv(B, TB)

    if TL == L:
        # Fused single-pass path: stats + normalize in one streamed kernel.
        if time_minor:
            x_spec = pl.BlockSpec((TB, C, L), lambda i: (i, 0, 0))
            wb = jnp.stack([w, b], axis=-1)                # (C, 2)
            wb_spec = pl.BlockSpec((C, 2), lambda i: (0, 0))
            stats_shape = (B, C, 2)
            stats_spec = pl.BlockSpec((TB, C, 2), lambda i: (i, 0, 0))
            xblk = _padded_block_bytes(TB, C, L)
        else:
            x_spec = pl.BlockSpec((TB, L, C), lambda i: (i, 0, 0))
            wb = jnp.stack([w, b], axis=0)                 # (2, C)
            wb_spec = pl.BlockSpec((2, C), lambda i: (0, 0))
            stats_shape = (B, 2, C)
            stats_spec = pl.BlockSpec((TB, 2, C), lambda i: (i, 0, 0))
            xblk = _padded_block_bytes(TB, L, C)

        yk, stats = pl.pallas_call(
            functools.partial(_norm_fused_kernel, time_minor=time_minor),
            out_shape=(jax.ShapeDtypeStruct(xk.shape, x.dtype),
                       jax.ShapeDtypeStruct(stats_shape, jnp.float32)),
            grid_spec=pltpu.PrefetchScalarGridSpec(
                num_scalar_prefetch=0,
                grid=(nb,),
                in_specs=[x_spec, wb_spec],
                out_specs=[x_spec, stats_spec],
            ),
            compiler_params=_compiler_params(("parallel",), xblk),
        )(xk, wb)
        mean, std = _stats_to_blc(stats, time_minor)
    else:
        # Large-L fallback: accumulate stats over an "arbitrary" L grid axis,
        # then apply the fused scale/shift with the elementwise kernel.
        nl = _cdiv(L, TL)
        if time_minor:
            x_spec = pl.BlockSpec((TB, C, TL), lambda i, l: (i, 0, l))
            stats_shape = (B, C, 2)
            stats_spec = pl.BlockSpec((TB, C, 2), lambda i, l: (i, 0, 0))
            xblk = _padded_block_bytes(TB, C, TL)
        else:
            x_spec = pl.BlockSpec((TB, TL, C), lambda i, l: (i, l, 0))
            stats_shape = (B, 2, C)
            stats_spec = pl.BlockSpec((TB, 2, C), lambda i, l: (i, 0, 0))
            xblk = _padded_block_bytes(TB, TL, C)

        stats = pl.pallas_call(
            functools.partial(_stats_accum_kernel, time_minor=time_minor,
                              seq_len=L, tile_len=TL, need_mask=(L % TL != 0)),
            out_shape=jax.ShapeDtypeStruct(stats_shape, jnp.float32),
            grid_spec=pltpu.PrefetchScalarGridSpec(
                num_scalar_prefetch=0,
                grid=(nb, nl),
                in_specs=[x_spec],
                out_specs=stats_spec,
            ),
            compiler_params=_compiler_params(("parallel", "arbitrary"), xblk),
        )(xk)
        mean, std = _stats_to_blc(stats, time_minor)
        # Tiny (B,1,C) rows: fold affine + 1/std into one scale/shift pair.
        scale = w[None, None, :] / std
        shift = b[None, None, :] - mean * scale
        yk = _apply_rows(xk, scale, shift, x.dtype, time_minor, TB, TL)

    y = jnp.swapaxes(yk, 1, 2) if time_minor else yk
    return y, mean, std


def revin_denorm(x, mean, stdev, affine_weight, affine_bias, *,
                 block_budget_bytes=_BLOCK_BUDGET_BYTES):
    """Inverse transform: x: (B, L, C), mean/stdev: (B, 1, C) -> (B, L, C)."""
    B, L, C = x.shape
    time_minor = _choose_time_minor(L, C)
    w = affine_weight.reshape(1, 1, C).astype(jnp.float32)
    b = affine_bias.reshape(1, 1, C).astype(jnp.float32)
    mean = mean.reshape(B, 1, C).astype(jnp.float32)
    std = stdev.reshape(B, 1, C).astype(jnp.float32)
    # Fold the whole denorm into a per-(batch, channel) scale/shift row (XLA side,
    # only B*C elements), so the streaming kernel is 2 VPU ops per element.
    scale = std / (w + EPS * EPS)
    shift = mean - b * scale

    xk = jnp.swapaxes(x, 1, 2) if time_minor else x
    TB, TL = _plan_tiles(B, L, C, time_minor, block_budget_bytes)
    yk = _apply_rows(xk, scale, shift, x.dtype, time_minor, TB, TL)
    return jnp.swapaxes(yk, 1, 2) if time_minor else yk


# ----------------------------------------------------------------------------
# Reference + self-test
# ----------------------------------------------------------------------------

def _reference(x, w, b):
    x32 = x.astype(jnp.float32)
    mean = jnp.mean(x32, axis=1, keepdims=True)
    var = jnp.mean(jnp.square(x32 - mean), axis=1, keepdims=True)
    std = jnp.sqrt(var + EPS)
    y = (x32 - mean) / std * w + b
    yd = (y - b) / (w + EPS * EPS) * std + mean
    return y, mean, std, yd


if __name__ == "__main__":
    key = jax.random.PRNGKey(0)
    # (B, L, C, forced per-block budget in bytes or None for default)
    cases = [
        (2, 24, 7, None),       # small C -> time-minor lane-dense fused path
        (2, 16, 128, None),     # C % 128 == 0 -> channel-minor fused path
        (5, 24, 7, 8192),       # forced TB split -> partial last batch block
        (3, 200, 7, 4096),      # forced L-split fallback (time-minor, masked tail)
        (2, 60, 128, 16384),    # forced L-split fallback (channel-minor, masked tail)
    ]
    for (B, L, C, budget) in cases:
        key, kx, kw, kb = jax.random.split(key, 4)
        x = jax.random.normal(kx, (B, L, C), dtype=jnp.float32) * 3.0 + 1.5
        # Module init uses ones/zeros; use non-trivial deterministic affine params
        # so the fused scale/shift path is actually exercised.
        affine_weight = 1.0 + 0.1 * jax.random.normal(kw, (C,), dtype=jnp.float32)
        affine_bias = 0.1 * jax.random.normal(kb, (C,), dtype=jnp.float32)
        kwargs = {} if budget is None else {"block_budget_bytes": budget}

        y, mean, stdev = revin_norm(x, affine_weight, affine_bias, **kwargs)       # 'norm'
        x_rec = revin_denorm(y, mean, stdev, affine_weight, affine_bias, **kwargs)  # 'denorm'
        jax.block_until_ready((y, mean, stdev, x_rec))

        y_ref, mean_ref, std_ref, yd_ref = _reference(x, affine_weight, affine_bias)
        assert y.shape == x.shape and mean.shape == (B, 1, C) and stdev.shape == (B, 1, C)
        assert jnp.allclose(y, y_ref, atol=1e-4, rtol=1e-4), ("y", B, L, C)
        assert jnp.allclose(mean, mean_ref, atol=1e-5, rtol=1e-5), ("mean", B, L, C)
        assert jnp.allclose(stdev, std_ref, atol=1e-4, rtol=1e-4), ("std", B, L, C)
        assert jnp.allclose(x_rec, yd_ref, atol=1e-4, rtol=1e-4), ("denorm", B, L, C)
        assert jnp.allclose(x_rec, x, atol=1e-3, rtol=1e-3), ("roundtrip", B, L, C)

    print("KERNEL_OK")
</pallas_src>

<mosaic_0001>
module attributes {stable_mosaic.version = 11 : i64} {
  func.func @_norm_fused_kernel(%arg0: i32, %arg1: memref<2x7x24xf32, #tpu.memory_space<vmem>>, %arg2: memref<7x2xf32, #tpu.memory_space<vmem>>, %arg3: memref<2x7x24xf32, #tpu.memory_space<vmem>>, %arg4: memref<2x7x2xf32, #tpu.memory_space<vmem>>) attributes {dimension_semantics = [#tpu.dimension_semantics<parallel>], iteration_bounds = array<i64: 1>, scalar_prefetch = 0 : i64, scratch_operands = 0 : i64, tpu.core_type = #tpu.core_type<tc>, window_params = [{transform_indices = @transform_0, window_bounds = array<i64: 2, 7, 24>}, {pipeline_mode = #tpu.pipeline_mode<synchronous>, transform_indices = @transform_1, window_bounds = array<i64: 7, 2>}, {transform_indices = @transform_2, window_bounds = array<i64: 2, 7, 24>}, {transform_indices = @transform_3, window_bounds = array<i64: 2, 7, 2>}]} {
    %c0 = arith.constant 0 : index
    %c0_0 = arith.constant 0 : index
    %c0_1 = arith.constant 0 : index
    %0 = vector.load %arg1[%c0, %c0_0, %c0_1] : memref<2x7x24xf32, #tpu.memory_space<vmem>>, vector<2x7x24xf32>
    %c0_2 = arith.constant 0 : index
    %c0_3 = arith.constant 0 : index
    %1 = vector.load %arg2[%c0_2, %c0_3] : memref<7x2xf32, #tpu.memory_space<vmem>>, vector<7x1xf32>
    %2 = vector.shape_cast %1 : vector<7x1xf32> to vector<1x7x1xf32>
    %c0_4 = arith.constant 0 : index
    %c1 = arith.constant 1 : index
    %3 = vector.load %arg2[%c0_4, %c1] : memref<7x2xf32, #tpu.memory_space<vmem>>, vector<7x1xf32>
    %4 = vector.shape_cast %3 : vector<7x1xf32> to vector<1x7x1xf32>
    %cst = arith.constant dense<0.000000e+00> : vector<2x7xf32>
    %5 = vector.multi_reduction <add>, %0, %cst [2] : vector<2x7x24xf32> to vector<2x7xf32>
    %6 = vector.shape_cast %5 : vector<2x7xf32> to vector<2x7x1xf32>
    %cst_5 = arith.constant 2.400000e+01 : f32
    %7 = vector.broadcast %cst_5 : f32 to vector<2x7x1xf32>
    %8 = arith.divf %6, %7 : vector<2x7x1xf32>
    %9 = vector.broadcast %8 : vector<2x7x1xf32> to vector<2x7x24xf32>
    %10 = arith.subf %0, %9 : vector<2x7x24xf32>
    %11 = arith.mulf %10, %10 : vector<2x7x24xf32>
    %cst_6 = arith.constant dense<0.000000e+00> : vector<2x7xf32>
    %12 = vector.multi_reduction <add>, %11, %cst_6 [2] : vector<2x7x24xf32> to vector<2x7xf32>
    %13 = vector.shape_cast %12 : vector<2x7xf32> to vector<2x7x1xf32>
    %cst_7 = arith.constant 2.400000e+01 : f32
    %14 = vector.broadcast %cst_7 : f32 to vector<2x7x1xf32>
    %15 = arith.divf %13, %14 : vector<2x7x1xf32>
    %cst_8 = arith.constant 9.99999974E-6 : f32
    %16 = vector.broadcast %cst_8 : f32 to vector<2x7x1xf32>
    %17 = arith.addf %15, %16 : vector<2x7x1xf32>
    %18 = math.sqrt %17 : vector<2x7x1xf32>
    %19 = vector.broadcast %2 : vector<1x7x1xf32> to vector<2x7x1xf32>
    %20 = arith.divf %19, %18 : vector<2x7x1xf32>
    %21 = arith.mulf %8, %20 : vector<2x7x1xf32>
    %22 = vector.broadcast %4 : vector<1x7x1xf32> to vector<2x7x1xf32>
    %23 = arith.subf %22, %21 : vector<2x7x1xf32>
    %24 = vector.broadcast %20 : vector<2x7x1xf32> to vector<2x7x24xf32>
    %25 = arith.mulf %0, %24 : vector<2x7x24xf32>
    %26 = vector.broadcast %23 : vector<2x7x1xf32> to vector<2x7x24xf32>
    %27 = arith.addf %25, %26 : vector<2x7x24xf32>
    %c0_9 = arith.constant 0 : index
    %c0_10 = arith.constant 0 : index
    %c0_11 = arith.constant 0 : index
    %28 = vector.load %arg3[%c0_9, %c0_10, %c0_11] : memref<2x7x24xf32, #tpu.memory_space<vmem>>, vector<2x7x24xf32>
    tpu.vector_store %arg3[%c0_9, %c0_10, %c0_11], %27 {strides = array<i32>} : memref<2x7x24xf32, #tpu.memory_space<vmem>>, vector<2x7x24xf32>,
    %c0_12 = arith.constant 0 : index
    %c0_13 = arith.constant 0 : index
    %c0_14 = arith.constant 0 : index
    %29 = vector.load %arg4[%c0_12, %c0_13, %c0_14] : memref<2x7x2xf32, #tpu.memory_space<vmem>>, vector<2x7x1xf32>
    tpu.vector_store %arg4[%c0_12, %c0_13, %c0_14], %8 {strides = array<i32>} : memref<2x7x2xf32, #tpu.memory_space<vmem>>, vector<2x7x1xf32>,
    %c0_15 = arith.constant 0 : index
    %c0_16 = arith.constant 0 : index
    %c1_17 = arith.constant 1 : index
    %30 = vector.load %arg4[%c0_15, %c0_16, %c1_17] : memref<2x7x2xf32, #tpu.memory_space<vmem>>, vector<2x7x1xf32>
    tpu.vector_store %arg4[%c0_15, %c0_16, %c1_17], %18 {strides = array<i32>} : memref<2x7x2xf32, #tpu.memory_space<vmem>>, vector<2x7x1xf32>,
    return
  }
  func.func @transform_0(%arg0: i32) -> (i32, i32, i32) {
    %c0_i32 = arith.constant 0 : i32
    %c0_i32_0 = arith.constant 0 : i32
    %c0_i32_1 = arith.constant 0 : i32
    return %arg0, %c0_i32, %c0_i32_0 : i32, i32, i32
  }
  func.func @transform_1(%arg0: i32) -> (i32, i32) {
    %c0_i32 = arith.constant 0 : i32
    %c0_i32_0 = arith.constant 0 : i32
    %c0_i32_1 = arith.constant 0 : i32
    return %c0_i32, %c0_i32_0 : i32, i32
  }
  func.func @transform_2(%arg0: i32) -> (i32, i32, i32) {
    %c0_i32 = arith.constant 0 : i32
    %c0_i32_0 = arith.constant 0 : i32
    %c0_i32_1 = arith.constant 0 : i32
    return %arg0, %c0_i32, %c0_i32_0 : i32, i32, i32
  }
  func.func @transform_3(%arg0: i32) -> (i32, i32, i32) {
    %c0_i32 = arith.constant 0 : i32
    %c0_i32_0 = arith.constant 0 : i32
    %c0_i32_1 = arith.constant 0 : i32
    return %arg0, %c0_i32, %c0_i32_0 : i32, i32, i32
  }
}

</mosaic_0001>

<llo_original>
// kernel: tpu_custom_call.1
$region0: #{tpu_custom_call.1}
  #allocation0 [shape = 'u32[]', space=smem, size = 0x4, offset = 0x4, fixed_abs, tag = 'smem constant byte address 0x4 - core index']
  #allocation1 [shape = 'u32[144,128]{1,0:T(1,128)}', space=vmem, size = 0x12000, scoped, tag = 'internal scratch']
  %s0 = inlined_call_operand.vmem [shape: f32[2,7,24], index: 0, kind: input, shape index: {}]
  %s1 = inlined_call_operand.vmem [shape: f32[7,2], index: 1, kind: input, shape index: {}]
  %s2 = inlined_call_operand.vmem [shape: f32[2,7,24], index: 2, kind: output, shape index: {0}]
  %s3 = inlined_call_operand.vmem [shape: f32[2,7,2], index: 3, kind: output, shape index: {1}]
  %4 = xla_tuple %s2, %s3
  %s5 = sld [smem:[#allocation0]]
  $region26: #{tpu_custom_call.1} parent=0
    _
  %s7 = ssub.s32 1, %s5
  %s8 = scalar_select 0, %s7, %s5
  // Predicated region
  $region2: #{tpu_custom_call.1} parent=0 // pred_check
    _
  $region3: #{tpu_custom_call.1} parent=0 // pred_check_branch
    %10 = sbr.rel (0) target = $region5
  $region4: #{tpu_custom_call.1} parent=0 // pred_region
    _
  $region5: #{tpu_custom_call.1} parent=0 // pred_fallthru
    _
  // Predicated region
  $region6: #{tpu_custom_call.1} parent=0 // pred_check
    _
  $region7: #{tpu_custom_call.1} parent=0 // pred_check_branch
    %12 = sbr.rel (0) target = $region9
  $region8: #{tpu_custom_call.1} parent=0 // pred_region
    _
  $region9: #{tpu_custom_call.1} parent=0 // pred_fallthru
    _
  %v13 = vld [vmem:[%s0] sm:$0x7f]
  %v14 = vld [vmem:[%s0 + $0x8] sm:$0x7f]
  %v15 = vld [vmem:[%s1] sm:$0x7f]
  %vm16 = vcmask 194560
  %v17 = vsel %vm16, %v13, 0.0
  %18 = vadd.xlane.f32.xlu0 %v17
  %v19 = vpop.xlane.xlu0 %18
  %v20 = vsel %vm16, %v14, 0.0
  %21 = vadd.xlane.f32.xlu0 %v20
  %v22 = vpop.xlane.xlu0 %21
  %v23 = vrcp.pop 24.0
  %v24 = vmul.f32 %v19, %v23
  %v25 = vmul.f32 %v22, %v23
  %v26 = vsub.f32 %v13, %v24
  %v27 = vsub.f32 %v14, %v25
  %v28 = vmul.f32 %v26, %v26
  %v29 = vmul.f32 %v27, %v27
  %v30 = vsel %vm16, %v28, 0.0
  %31 = vadd.xlane.f32.xlu0 %v30
  %v32 = vpop.xlane.xlu0 %31
  %v33 = vsel %vm16, %v29, 0.0
  %34 = vadd.xlane.f32.xlu0 %v33
  %v35 = vpop.xlane.xlu0 %34
  %v36 = vmul.f32 %v32, %v23
  %v37 = vmul.f32 %v35, %v23
  %v38 = vadd.f32 %v36, 1e-05
  %v39 = vadd.f32 %v37, 1e-05
  %v40 = vrsqrt.pop %v38
  %v41 = vmul.f32 %v38, %v40
  %vm42 = vcmp.eq.f32.partialorder %v38, inf
  %v43 = vsel %vm42, %v38, %v41
  %vm44 = vcmp.eq.f32.partialorder %v38, 0.0
  %v45 = vand.u32 %v38, 2147483648
  %v46 = vsel %vm44, %v45, %v43
  %v47 = vrsqrt.pop %v39
  %v48 = vmul.f32 %v39, %v47
  %vm49 = vcmp.eq.f32.partialorder %v39, inf
  %v50 = vsel %vm49, %v39, %v48
  %vm51 = vcmp.eq.f32.partialorder %v39, 0.0
  %v52 = vand.u32 %v39, 2147483648
  %v53 = vsel %vm51, %v52, %v50
  %v54 = vrcp.pop %v46
  %v55 = vmul.f32 %v15, %v54
  %v56 = vrcp.pop %v53
  %v57 = vmul.f32 %v15, %v56
  %v58 = vmul.f32 %v24, %v55
  %v59 = vmul.f32 %v25, %v57
  %62 = vrot.lane.b32.xlu0 %v58, 1
  %v63 = vpop.permute.xlu0 %62
  %64 = vrot.lane.b32.xlu0 %v59, 1
  %v65 = vpop.permute.xlu0 %64
  %v68 = vsub.f32 %v15, %v63
  %v69 = vsub.f32 %v15, %v65
  %71 = vset.pattern.permute.xlu0 0
  %72 = vperm.xlu0 %71, %v55
  %v73 = vpop.permute.xlu0 %72
  %76 = vset.pattern.permute.xlu0 0
  %77 = vperm.xlu0 %76, %v57
  %v78 = vpop.permute.xlu0 %77
  %v80 = vmul.f32 %v13, %v73
  %v81 = vmul.f32 %v14, %v78
  %83 = vset.pattern.permute.xlu0 1
  %84 = vperm.xlu0 %83, %v68
  %v85 = vpop.permute.xlu0 %84
  %88 = vset.pattern.permute.xlu0 1
  %89 = vperm.xlu0 %88, %v69
  %v90 = vpop.permute.xlu0 %89
  %v92 = vadd.f32 %v80, %v85
  %v93 = vadd.f32 %v81, %v90
  %94 = vst.msk [vmem:[%s2] sm:$0x7f] %vm16, %v92
  %95 = vst.msk [vmem:[%s2 + $0x8] sm:$0x7f] %vm16, %v93
  %vm96 = vcmask 6144
  %97 = vst.msk [vmem:[%s3] sm:$0x7f] %vm96, %v24
  %98 = vst.msk [vmem:[%s3 + $0x8] sm:$0x7f] %vm96, %v25
  %vm99 = vcmask 14344
  %100 = vst.msk [vmem:[%s3] sm:$0x7f] %vm99, %v46
  %101 = vst.msk [vmem:[%s3 + $0x8] sm:$0x7f] %vm99, %v53
  // Predicated region
  $region10: #{tpu_custom_call.1} parent=0 // pred_check
    _
  $region11: #{tpu_custom_call.1} parent=0 // pred_check_branch
    %103 = sbr.rel (0) target = $region13
  $region12: #{tpu_custom_call.1} parent=0 // pred_region
    _
  $region13: #{tpu_custom_call.1} parent=0 // pred_fallthru
    _
  // Predicated region
  $region14: #{tpu_custom_call.1} parent=0 // pred_check
    _
  $region15: #{tpu_custom_call.1} parent=0 // pred_check_branch
    %105 = sbr.rel (0) target = $region17
  $region16: #{tpu_custom_call.1} parent=0 // pred_region
    _
  $region17: #{tpu_custom_call.1} parent=0 // pred_fallthru
    _
  // Predicated region
  $region18: #{tpu_custom_call.1} parent=0 // pred_check
    _
  $region19: #{tpu_custom_call.1} parent=0 // pred_check_branch
    %107 = sbr.rel (0) target = $region21
  $region20: #{tpu_custom_call.1} parent=0 // pred_region
    _
  $region21: #{tpu_custom_call.1} parent=0 // pred_fallthru
    _
  // Predicated region
  $region22: #{tpu_custom_call.1} parent=0 // pred_check
    _
  $region23: #{tpu_custom_call.1} parent=0 // pred_check_branch
    %109 = sbr.rel (0) target = $region25
  $region24: #{tpu_custom_call.1} parent=0 // pred_region
    _
  $region25: #{tpu_custom_call.1} parent=0 // pred_fallthru
    _

</llo_original>
